<compile_context>
chip_gen: v5e
topology: v5e:2x2
jax: 0.10.0
libtpu: 0.0.40
codegen_flags: <defaults>
</compile_context>

<pallas_src>
import functools

import jax
import jax.numpy as jnp
from jax import lax
from jax.experimental import pallas as pl
from jax.experimental.pallas import tpu as pltpu


def _round_up(n: int, m: int) -> int:
    return ((n + m - 1) // m) * m


def _centroid_kernel(x_ref, c_ref, c2_ref, out_ref, *,
                     num_classes: int, n_centroids: int):
    x = x_ref[...].astype(jnp.float32)     # (TB, D)
    c = c_ref[...].astype(jnp.float32)     # (K, D)  interleaved: row j*C + cls
    c2 = c2_ref[...].astype(jnp.float32)   # (K, 1)  precomputed ||c||^2

    # Cross term in transposed (K, TB) layout (lane axis = batch -> lane-dense
    # downstream).  dot_general contracts the feature axis of both operands,
    # so no transpose of x or c is materialized.
    xc_t = lax.dot_general(c, x, (((1,), (1,)), ((), ())),
                           preferred_element_type=jnp.float32)      # (K, TB)

    # ||x||^2 as a lane-major (1, TB) row via a tiny ones-row matmul (MXU),
    # avoiding a cross-lane reduce + relayout.
    ones_row = jnp.ones((1, x.shape[1]), jnp.float32)
    x2_t = lax.dot_general(ones_row, x * x, (((1,), (1,)), ((), ())),
                           preferred_element_type=jnp.float32)      # (1, TB)

    # Partial squared distance: ||c||^2 - 2 x.c.  ||x||^2 is constant per
    # batch column, so it cannot change the per-class argmin -> add it later.
    g = c2 - 2.0 * xc_t                                             # (K, TB)

    # Per-class min over n_centroids contiguous sublane groups (interleaved
    # centroid layout) -> pure elementwise minimum tree.
    cls_min = g[0:num_classes, :]
    for j in range(1, n_centroids):
        cls_min = jnp.minimum(
            cls_min, g[j * num_classes:(j + 1) * num_classes, :])

    class_d2 = jnp.maximum(cls_min + x2_t, 0.0)                     # (C, TB)
    class_dist = jnp.sqrt(class_d2)                                 # (C, TB)
    min_dist = jnp.min(class_dist, axis=0, keepdims=True)           # (1, TB)

    # Pack both results into one lane-dense slab: rows 0..C-1 = -class_dist,
    # row C = min_dist.
    packed = jnp.concatenate([-class_dist, min_dist], axis=0)       # (C+1, TB)
    out_ref[...] = packed.astype(out_ref.dtype)


def centroid_layer_forward(x, centroids, num_classes: int, n_centroids: int,
                           block_b: int = 512):
    """x: (B, D) float32, centroids: (num_classes*n_centroids, D) float32.

    Returns (-class_distances (B, num_classes), outlier_scores (B,)).
    """
    B, D = x.shape
    K = centroids.shape[0]
    assert K == num_classes * n_centroids

    # Interleave centroid rows: new row (j*num_classes + cls) = class cls's
    # j-th centroid, so per-class mins are contiguous sublane groups.
    c_inter = jnp.transpose(
        centroids.reshape(num_classes, n_centroids, D), (1, 0, 2)
    ).reshape(K, D).astype(jnp.float32)
    c2 = jnp.sum(c_inter * c_inter, axis=-1, keepdims=True)         # (K, 1)

    # Batch tile: the output's last (lane) dim is the batch tile, so it must
    # be a multiple of 128 unless it spans the whole padded batch.
    block_b = max(128, _round_up(block_b, 128))
    if _round_up(B, 8) <= block_b:
        tb = b_pad = _round_up(B, 8)        # single tile, full extent
    else:
        tb = block_b                        # multiple of 128
        b_pad = _round_up(B, tb)

    x_p = x.astype(jnp.float32)
    if b_pad != B:
        x_p = jnp.pad(x_p, ((0, b_pad - B), (0, 0)))

    grid = (b_pad // tb,)
    n_out_rows = num_classes + 1

    # VMEM budget: x + output double-buffered, centroids resident, temps.
    vmem_bytes = 4 * (2 * tb * D                     # x (double-buffered)
                      + K * D + K                    # centroids + ||c||^2
                      + 2 * n_out_rows * tb          # packed output
                      + 3 * K * tb)                  # xc_t / g temporaries
    vmem_limit = int(min(max(2 * vmem_bytes, 8 << 20), 64 << 20))

    cost = pl.CostEstimate(
        flops=2 * b_pad * (K + 1) * D,
        transcendentals=b_pad * num_classes,          # sqrt of class mins
        bytes_accessed=4 * (b_pad * D + K * D + K + n_out_rows * b_pad))

    kernel = functools.partial(
        _centroid_kernel, num_classes=num_classes, n_centroids=n_centroids)

    out = pl.pallas_call(
        kernel,
        grid=grid,
        in_specs=[
            pl.BlockSpec((tb, D), lambda i: (i, 0)),   # x tile
            pl.BlockSpec((K, D), lambda i: (0, 0)),    # centroids (resident)
            pl.BlockSpec((K, 1), lambda i: (0, 0)),    # ||c||^2 (resident)
        ],
        out_specs=pl.BlockSpec((n_out_rows, tb), lambda i: (0, i)),
        out_shape=jax.ShapeDtypeStruct((n_out_rows, b_pad), jnp.float32),
        compiler_params=pltpu.CompilerParams(
            dimension_semantics=("parallel",),          # megacore sharding
            vmem_limit_bytes=vmem_limit),
        cost_estimate=cost,
    )(x_p, c_inter, c2)

    neg_class_dist = out[:num_classes, :B].T             # (B, num_classes)
    min_dist = out[num_classes, :B]                      # (B,)

    # Batch-wide outlier stats in plain JAX (couples all rows; cheap O(B)).
    # Matches the module: unbiased std when B > 1, std = 1.0 when B == 1.
    mean_d = jnp.mean(min_dist)
    std_d = jnp.std(min_dist, ddof=1) if B > 1 else jnp.float32(1.0)
    outlier = (min_dist - mean_d) / (std_d + 1e-6)
    return neg_class_dist, outlier


if __name__ == "__main__":
    feature_dim = 32
    num_classes = 4
    n_centroids_per_class = 2
    batch = 8

    key = jax.random.PRNGKey(0)
    kx, kc = jax.random.split(key)

    # Deterministic synthetic parameters: randn(...) * 0.1 like the module init.
    centroids = jax.random.normal(
        kc, (num_classes * n_centroids_per_class, feature_dim),
        dtype=jnp.float32) * 0.1
    x = jax.random.normal(kx, (batch, feature_dim), dtype=jnp.float32)

    neg_class_dist, outlier_scores = centroid_layer_forward(
        x, centroids, num_classes, n_centroids_per_class)
    jax.block_until_ready((neg_class_dist, outlier_scores))

    # Pure-JAX reference check.
    dist_ref = jnp.sqrt(
        jnp.sum((x[:, None, :] - centroids[None, :, :]) ** 2, axis=-1))
    class_dist_ref = jnp.min(
        dist_ref.reshape(batch, num_classes, n_centroids_per_class), axis=-1)
    min_d = jnp.min(class_dist_ref, axis=1)
    mean_d = jnp.mean(min_d)
    std_d = jnp.std(min_d, ddof=1)
    outlier_ref = (min_d - mean_d) / (std_d + 1e-6)

    assert jnp.allclose(neg_class_dist, -class_dist_ref, atol=1e-4), \
        "class_dist mismatch"
    assert jnp.allclose(outlier_scores, outlier_ref, atol=1e-4), \
        "outlier mismatch"

    print("KERNEL_OK")
</pallas_src>

<mosaic_0001>
module attributes {stable_mosaic.version = 11 : i64} {
  func.func @_centroid_kernel(%arg0: i32, %arg1: memref<8x32xf32, #tpu.memory_space<vmem>>, %arg2: memref<8x32xf32, #tpu.memory_space<vmem>>, %arg3: memref<8x1xf32, #tpu.memory_space<vmem>>, %arg4: memref<5x8xf32, #tpu.memory_space<vmem>>) attributes {dimension_semantics = [#tpu.dimension_semantics<parallel>], iteration_bounds = array<i64: 1>, scalar_prefetch = 0 : i64, scratch_operands = 0 : i64, tpu.core_type = #tpu.core_type<tc>, window_params = [{transform_indices = @transform_0, window_bounds = array<i64: 8, 32>}, {pipeline_mode = #tpu.pipeline_mode<synchronous>, transform_indices = @transform_1, window_bounds = array<i64: 8, 32>}, {pipeline_mode = #tpu.pipeline_mode<synchronous>, transform_indices = @transform_2, window_bounds = array<i64: 8, 1>}, {transform_indices = @transform_3, window_bounds = array<i64: 5, 8>}]} {
    %c0 = arith.constant 0 : index
    %c0_0 = arith.constant 0 : index
    %0 = vector.load %arg1[%c0, %c0_0] : memref<8x32xf32, #tpu.memory_space<vmem>>, vector<8x32xf32>
    %c0_1 = arith.constant 0 : index
    %c0_2 = arith.constant 0 : index
    %1 = vector.load %arg2[%c0_1, %c0_2] : memref<8x32xf32, #tpu.memory_space<vmem>>, vector<8x32xf32>
    %c0_3 = arith.constant 0 : index
    %c0_4 = arith.constant 0 : index
    %2 = vector.load %arg3[%c0_3, %c0_4] : memref<8x1xf32, #tpu.memory_space<vmem>>, vector<8x1xf32>
    %cst = arith.constant dense<0.000000e+00> : vector<8x8xf32>
    %3 = tpu.matmul %1, %0, %cst {dimension_numbers = #tpu.dot_dimension_numbers<[1], [1], [0], [0], [0, 0, 1, 0], [], []>} : vector<8x32xf32>, vector<8x32xf32>, vector<8x8xf32> -> vector<8x8xf32>
    %cst_5 = arith.constant 1.000000e+00 : f32
    %4 = vector.broadcast %cst_5 : f32 to vector<1x32xf32>
    %5 = arith.mulf %0, %0 : vector<8x32xf32>
    %cst_6 = arith.constant dense<0.000000e+00> : vector<1x8xf32>
    %6 = tpu.matmul %4, %5, %cst_6 {dimension_numbers = #tpu.dot_dimension_numbers<[1], [1], [0], [0], [0, 0, 1, 0], [], []>} : vector<1x32xf32>, vector<8x32xf32>, vector<1x8xf32> -> vector<1x8xf32>
    %cst_7 = arith.constant 2.000000e+00 : f32
    %7 = vector.broadcast %cst_7 : f32 to vector<8x8xf32>
    %8 = arith.mulf %7, %3 : vector<8x8xf32>
    %9 = vector.broadcast %2 : vector<8x1xf32> to vector<8x8xf32>
    %10 = arith.subf %9, %8 : vector<8x8xf32>
    %11 = vector.extract_strided_slice %10 {offsets = [0, 0], sizes = [4, 8], strides = [1, 1]} : vector<8x8xf32> to vector<4x8xf32>
    %12 = vector.extract_strided_slice %10 {offsets = [4, 0], sizes = [4, 8], strides = [1, 1]} : vector<8x8xf32> to vector<4x8xf32>
    %13 = arith.minimumf %11, %12 : vector<4x8xf32>
    %14 = vector.broadcast %6 : vector<1x8xf32> to vector<4x8xf32>
    %15 = arith.addf %13, %14 : vector<4x8xf32>
    %cst_8 = arith.constant 0.000000e+00 : f32
    %16 = vector.broadcast %cst_8 : f32 to vector<4x8xf32>
    %17 = arith.maximumf %15, %16 : vector<4x8xf32>
    %18 = math.sqrt %17 : vector<4x8xf32>
    %cst_9 = arith.constant dense<0x7F800000> : vector<8xf32>
    %19 = vector.multi_reduction <minimumf>, %18, %cst_9 [0] : vector<4x8xf32> to vector<8xf32>
    %20 = vector.shape_cast %19 : vector<8xf32> to vector<1x8xf32>
    %cst_10 = arith.constant 0.000000e+00 : f32
    %21 = vector.broadcast %cst_10 : f32 to vector<4x8xf32>
    %22 = arith.subf %21, %18 : vector<4x8xf32>
    %23 = tpu.concatenate %22, %20 in 0 : vector<4x8xf32>, vector<1x8xf32> -> vector<5x8xf32>
    %c0_11 = arith.constant 0 : index
    %c0_12 = arith.constant 0 : index
    %24 = vector.load %arg4[%c0_11, %c0_12] : memref<5x8xf32, #tpu.memory_space<vmem>>, vector<5x8xf32>
    tpu.vector_store %arg4[%c0_11, %c0_12], %23 {strides = array<i32>} : memref<5x8xf32, #tpu.memory_space<vmem>>, vector<5x8xf32>,
    return
  }
  func.func @transform_0(%arg0: i32) -> (i32, i32) {
    %c0_i32 = arith.constant 0 : i32
    %c0_i32_0 = arith.constant 0 : i32
    return %arg0, %c0_i32 : i32, i32
  }
  func.func @transform_1(%arg0: i32) -> (i32, i32) {
    %c0_i32 = arith.constant 0 : i32
    %c0_i32_0 = arith.constant 0 : i32
    %c0_i32_1 = arith.constant 0 : i32
    return %c0_i32, %c0_i32_0 : i32, i32
  }
  func.func @transform_2(%arg0: i32) -> (i32, i32) {
    %c0_i32 = arith.constant 0 : i32
    %c0_i32_0 = arith.constant 0 : i32
    %c0_i32_1 = arith.constant 0 : i32
    return %c0_i32, %c0_i32_0 : i32, i32
  }
  func.func @transform_3(%arg0: i32) -> (i32, i32) {
    %c0_i32 = arith.constant 0 : i32
    %c0_i32_0 = arith.constant 0 : i32
    return %c0_i32, %arg0 : i32, i32
  }
}

</mosaic_0001>

<llo_original>
// kernel: tpu_custom_call.1
$region0: #{tpu_custom_call.1}
  #allocation0 [shape = 'u32[]', space=smem, size = 0x4, offset = 0x4, fixed_abs, tag = 'smem constant byte address 0x4 - core index']
  #allocation1 [shape = 'u32[72,128]{1,0:T(1,128)}', space=vmem, size = 0x9000, scoped, tag = 'internal scratch']
  %s0 = inlined_call_operand.vmem [shape: f32[8,32], index: 0, kind: input, shape index: {}]
  %s1 = inlined_call_operand.hbm [shape: f32[8,32], index: 1, kind: input, shape index: {}]
  %s2 = inlined_call_operand.vmem [shape: f32[8,1], index: 2, kind: input, shape index: {}]
  %s3 = inlined_call_operand.hbm [shape: f32[5,8], index: 3, kind: output, shape index: {}]
  %s4 = sld [smem:[#allocation0]]
  $region26: #{tpu_custom_call.1} parent=0
    _
  %s6 = ssub.s32 1, %s4
  %s7 = scalar_select 0, %s6, %s4
  $region1: #{tpu_custom_call.1} parent=0
    #allocation2 [shape = 'u8[4096]{0}', space=vmem, size = 0x1000, scoped, tag = 'input window, operand 1, single buffered']
    #allocation3 [shape = 's32[1]{0}', space=sflag, size = 0x4, scoped, tag = 'scoped memory for tpu_custom_call.1']
    #allocation4 [shape = 's32[1]{0}', space=sflag, size = 0x4, scoped, tag = 'scoped memory for tpu_custom_call.1']
    #allocation5 [shape = 'u8[4096]{0}', space=vmem, size = 0x1000, scoped, tag = 'output window, operand 0, single buffered']
    %8 = vsyncpa [#allocation3], 0
    %9 = vsyncpa [#allocation4], 0
    // Predicated region
    $region2: #{tpu_custom_call.1} parent=1 // pred_check
      _
    $region3: #{tpu_custom_call.1} parent=1 // pred_check_branch
      %11 = sbr.rel (0) target = $region5
    $region4: #{tpu_custom_call.1} parent=1 // pred_region
      _
    $region5: #{tpu_custom_call.1} parent=1 // pred_fallthru
      _
    // Predicated region
    $region6: #{tpu_custom_call.1} parent=1 // pred_check
      _
    $region7: #{tpu_custom_call.1} parent=1 // pred_check_branch
      %13 = sbr.rel (0) target = $region9
    $region8: #{tpu_custom_call.1} parent=1 // pred_region
      %15 = vsyncadd [#allocation3], 0
      %s17 = sshll.u32 %s1, 4
      %s18 = int_to_ptr.hbm [resolvable:$true] %s17
      %s19 = sshll.u32 [#allocation2], 4
      %s20 = int_to_ptr.vmem [resolvable:$true] %s19
      %22 = dma.hbm_to_vmem [thread:$0]  %s18, 128, %s20, [#allocation3]
    $region9: #{tpu_custom_call.1} parent=1 // pred_fallthru
      _
    // Predicated region
    $region10: #{tpu_custom_call.1} parent=1 // pred_check
      _
    $region11: #{tpu_custom_call.1} parent=1 // pred_check_branch
      %24 = sbr.rel (0) target = $region13
    $region12: #{tpu_custom_call.1} parent=1 // pred_region
      _
    $region13: #{tpu_custom_call.1} parent=1 // pred_fallthru
      _
    // Predicated region
    $region14: #{tpu_custom_call.1} parent=1 // pred_check
      _
    $region15: #{tpu_custom_call.1} parent=1 // pred_check_branch
      %26 = sbr.rel (0) target = $region17
    $region16: #{tpu_custom_call.1} parent=1 // pred_region
      %28 = dma.done [#allocation3], 128
    $region17: #{tpu_custom_call.1} parent=1 // pred_fallthru
      _
    %v29 = vld [vmem:[%s0] sm:$0xff]
    %v30 = vld [vmem:[#allocation2] sm:$0xff]
    %v31 = vld [vmem:[%s2] sm:$0xff]
    %vm32 = vcmask 261120
    %v34 = vsel %vm32, %v30, 0
    %v37 = vsel %vm32, %v29, 0
    %39 = vmatpush.xpose.msra.mxu0 0.0
    %40 = vmatpush.xpose.msra.mxu0 0.0
    %41 = vmatpush.xpose.msra.mxu0 0.0
    %42 = vmatpush.xpose.msra.mxu0 0.0
    %43 = vmatpush.xpose.msra.mxu0 0.0
    %44 = vmatpush.xpose.msra.mxu0 0.0
    %45 = vmatpush.xpose.msra.mxu0 0.0
    %46 = vmatpush.xpose.msra.mxu0 0.0
    %47 = vmatpush.xpose.msra.mxu0 0.0
    %48 = vmatpush.xpose.msra.mxu0 0.0
    %49 = vmatpush.xpose.msra.mxu0 0.0
    %50 = vmatpush.xpose.msra.mxu0 0.0
    %51 = vmatpush.xpose.msra.mxu0 0.0
    %52 = vmatpush.xpose.msra.mxu0 0.0
    %53 = vmatpush.xpose.msra.mxu0 0.0
    %54 = vmatpush.xpose.msra.mxu0 %v37
    %55 = vmatmul.f32.gmra.mxu0 %v34
    %v56 = vpop.f32.mrf.mxu0
    %v57 = vadd.f32 0.0, %v56
    %58 = vdwg.mxu0
    %v59 = vmul.f32 %v29, %v29
    %v61 = vsel %vm32, 1.0, 0
    %v64 = vsel %vm32, %v59, 0
    %66 = vmatpush.xpose.msra.mxu0 0.0
    %67 = vmatpush.xpose.msra.mxu0 0.0
    %68 = vmatpush.xpose.msra.mxu0 0.0
    %69 = vmatpush.xpose.msra.mxu0 0.0
    %70 = vmatpush.xpose.msra.mxu0 0.0
    %71 = vmatpush.xpose.msra.mxu0 0.0
    %72 = vmatpush.xpose.msra.mxu0 0.0
    %73 = vmatpush.xpose.msra.mxu0 0.0
    %74 = vmatpush.xpose.msra.mxu0 0.0
    %75 = vmatpush.xpose.msra.mxu0 0.0
    %76 = vmatpush.xpose.msra.mxu0 0.0
    %77 = vmatpush.xpose.msra.mxu0 0.0
    %78 = vmatpush.xpose.msra.mxu0 0.0
    %79 = vmatpush.xpose.msra.mxu0 0.0
    %80 = vmatpush.xpose.msra.mxu0 0.0
    %81 = vmatpush.xpose.msra.mxu0 %v64
    %82 = vmatmul.f32.gmra.mxu0 %v61
    %v83 = vpop.f32.mrf.mxu0
    %v84 = vadd.f32 0.0, %v83
    %85 = vdwg.mxu0
    %v86 = vmul.f32 %v57, 2.0
    %88 = vset.pattern.permute.xlu0 0
    %89 = vperm.xlu0 %88, %v31
    %v90 = vpop.permute.xlu0 %89
    %v92 = vsub.f32 %v90, %v86
    %v94 = vrot.slane %v92, 4
    %v96 = vmin.f32 %v92, %v94
    %v97 = vperm.slane %v84, 0
    %v98 = vadd.f32 %v96, %v97
    %v99 = vmax.f32 %v98, 0.0
    %v100 = vrsqrt.pop %v99
    %v101 = vmul.f32 %v100, %v99
    %v102 = vmul.f32 %v101, %v100
    %v103 = vmul.f32 0.5, %v102
    %v104 = vsub.f32 1.5, %v103
    %v105 = vmul.f32 %v100, %v104
    %v106 = vmul.f32 %v99, %v105
    %vm107 = vcmp.eq.f32.partialorder %v99, inf
    %v108 = vsel %vm107, %v99, %v106
    %vm109 = vcmp.eq.f32.partialorder %v99, 0.0
    %v110 = vand.u32 %v99, 2147483648
    %v111 = vsel %vm109, %v110, %v108
    %vm112 = vcmask 60416
    %v113 = vsel %vm112, %v111, inf
    %v114 = vrot.slane %v113, 4
    %v115 = vmin.f32 %v113, %v114
    %v116 = vrot.slane %v115, 2
    %v117 = vmin.f32 %v115, %v116
    %v118 = vrot.slane %v117, 1
    %v119 = vmin.f32 %v117, %v118
    %v120 = vsub.f32 0.0, %v111
    %vm121 = vcmask 1043456
    %v122 = vsel %vm121, %v120, %v119
    %vm123 = vcmask 61440
    %124 = vst.msk [vmem:[#allocation5] sm:$0x1f] %vm123, %v122
    // Predicated region
    $region18: #{tpu_custom_call.1} parent=1 // pred_check
      _
    $region19: #{tpu_custom_call.1} parent=1 // pred_check_branch
      %126 = sbr.rel (0) target = $region21
    $region20: #{tpu_custom_call.1} parent=1 // pred_region
      %128 = vsyncadd [#allocation4], 0
      %s130 = sshll.u32 [#allocation5], 4
      %s131 = int_to_ptr.vmem [resolvable:$true] %s130
      %s132 = sshll.u32 %s3, 4
      %s133 = int_to_ptr.hbm [resolvable:$true] %s132
      %135 = dma.vmem_to_hbm [thread:$0]  %s131, 128, %s133, [#allocation4]
    $region21: #{tpu_custom_call.1} parent=1 // pred_fallthru
      _
    // Predicated region
    $region22: #{tpu_custom_call.1} parent=1 // pred_check
      _
    $region23: #{tpu_custom_call.1} parent=1 // pred_check_branch
      %137 = sbr.rel (0) target = $region25
    $region24: #{tpu_custom_call.1} parent=1 // pred_region
      %139 = dma.done [#allocation4], 128
    $region25: #{tpu_custom_call.1} parent=1 // pred_fallthru
      _
    %140 = vsyncpa [#allocation3], 1
    %141 = vsyncpa [#allocation4], 1

</llo_original>
